<compile_context>
chip_gen: v7x
topology: tpu7x:2x2x1
jax: 0.10.0
libtpu: 0.0.40
codegen_flags: <defaults>
</compile_context>

<pallas_src>
import jax
import jax.numpy as jnp
from jax.experimental import pallas as pl
from jax.experimental.pallas import tpu as pltpu


def _round_up(a, b):
    return (a + b - 1) // b * b


def _vmem_limits():
    """Chip-aware VMEM limit + working budget with a v7x-safe fallback."""
    phys = 64 * 1024 * 1024          # conservative default: v7x per-TC VMEM
    try:
        info = pltpu.get_tpu_info()
        cap = getattr(info, "vmem_capacity_bytes", None)
        if cap:
            phys = int(cap)
    except Exception:
        pass
    # leave headroom for compiler scratch / spill
    limit = min(int(phys * 3 // 4), 100 * 1024 * 1024)
    budget = int(limit * 7 // 10)
    return limit, budget


def _make_kernel(eps):
    def kernel(x_ref, c_ref, ww_ref, wb_ref, g_ref, b_ref, o_ref):
        # x in f32 for the statistics; cond / projection weights stay in their
        # native dtype (bf16-friendly MXU), accumulation is f32.
        x = x_ref[...].astype(jnp.float32)                       # (rt, H)
        c = c_ref[...]                                           # (rt, C)

        w = jnp.dot(c, ww_ref[...],
                    preferred_element_type=jnp.float32) + g_ref[...]   # (rt, H)
        b = jnp.dot(c, wb_ref[...],
                    preferred_element_type=jnp.float32) + b_ref[...]   # (rt, H)

        # One-pass stats: E[x], E[x^2]  (all f32).
        mean = jnp.mean(x, axis=-1, keepdims=True)                # (rt, 1)
        mean2 = jnp.mean(x * x, axis=-1, keepdims=True)           # (rt, 1)
        var = mean2 - mean * mean
        inv = jax.lax.rsqrt(var + eps)                            # EUP slot

        # (x - mean) * inv * w + b  ==  x * s + t
        s = inv * w
        t = b - mean * s
        o_ref[...] = (x * s + t).astype(o_ref.dtype)

    return kernel


def conditional_layer_norm(x, cond, gamma, beta, w_weight, w_bias,
                           eps=1e-12, target_tile_bytes=2 * 1024 * 1024,
                           max_row_tile=2048):
    """
    x:        (B, S, H)   inputs
    cond:     (B, S, C)   condition
    gamma:    (H,)        self.weight
    beta:     (H,)        self.bias
    w_weight: (H, C)      self.weight_dense.weight (PyTorch Linear layout)
    w_bias:   (H, C)      self.bias_dense.weight
    """
    B, S, H = x.shape
    C = cond.shape[-1]
    N = B * S
    out_dtype = x.dtype

    # Flatten rows; preserve native I/O dtype (bf16 in -> bf16 out).
    x2 = x.reshape(N, H)
    c2 = cond.reshape(N, C)

    # Projection weights in the cond's native dtype; gamma/beta in f32.
    ww_t = w_weight.T.astype(c2.dtype)             # (C, H)
    wb_t = w_bias.T.astype(c2.dtype)               # (C, H)
    g2 = gamma.reshape(1, H).astype(jnp.float32)
    b2 = beta.reshape(1, H).astype(jnp.float32)

    itm_x = x2.dtype.itemsize
    itm_c = c2.dtype.itemsize
    itm_w = ww_t.dtype.itemsize
    itm_o = jnp.dtype(out_dtype).itemsize

    # Sublane multiple for the I/O dtype: 8 (f32), 16 (bf16), 32 (int8/fp8).
    sub = max(8, 32 // max(itm_x, 1))

    # --- H-aware row-tile selection: keep per-step x-stream DMAs large. ---
    rt = _round_up(max(1, target_tile_bytes // max(1, H * itm_x)), sub)
    rt = min(rt, _round_up(max_row_tile, sub))
    # Largest sublane multiple that does not exceed the row count (or `sub`
    # if N is tiny); the last grid step may still be a partial block.
    rt = min(rt, max(sub, (N // sub) * sub))
    rt = max(rt, sub)

    vmem_limit, vmem_budget = _vmem_limits()

    def _vmem_bytes(tile):
        # double-buffered row tiles (x, cond, out)
        io = 2 * tile * H * itm_x + 2 * tile * C * itm_c + 2 * tile * H * itm_o
        # single-buffered constants (two (C,H) weights + gamma/beta in f32)
        consts = 2 * C * H * itm_w + 2 * H * 4
        # live f32 temporaries: x, x*x, w, b, s, t, result (+ slack)
        f32_tmp = 8 * tile * H * 4
        return io + consts + f32_tmp

    while rt > sub and _vmem_bytes(rt) > vmem_budget:
        rt = max(sub, _round_up(rt // 2, sub))

    grid = (pl.cdiv(N, rt),)                       # no padding, no output slice
    const = dict(pipeline_mode=pl.Buffered(1))     # constants: no double buffer

    in_specs = [
        pl.BlockSpec((rt, H), lambda i: (i, 0)),           # x rows
        pl.BlockSpec((rt, C), lambda i: (i, 0)),           # cond rows
        pl.BlockSpec((C, H), lambda i: (0, 0), **const),   # weight_dense.weight^T
        pl.BlockSpec((C, H), lambda i: (0, 0), **const),   # bias_dense.weight^T
        pl.BlockSpec((1, H), lambda i: (0, 0), **const),   # gamma
        pl.BlockSpec((1, H), lambda i: (0, 0), **const),   # beta
    ]

    out = pl.pallas_call(
        _make_kernel(float(eps)),
        out_shape=jax.ShapeDtypeStruct((N, H), out_dtype),
        grid_spec=pltpu.PrefetchScalarGridSpec(
            num_scalar_prefetch=0,
            grid=grid,
            in_specs=in_specs,
            out_specs=pl.BlockSpec((rt, H), lambda i: (i, 0)),
        ),
        compiler_params=pltpu.CompilerParams(
            dimension_semantics=("parallel",),
            vmem_limit_bytes=vmem_limit,
        ),
    )(x2, c2, ww_t, wb_t, g2, b2)

    return out.reshape(B, S, H)


def _reference(x, cond, gamma, beta, w_weight, w_bias, eps=1e-12):
    # Pure-JAX mirror of the PyTorch forward (f32).
    weight = cond @ w_weight.T + gamma
    bias = cond @ w_bias.T + beta
    mean = jnp.mean(x, axis=-1, keepdims=True)
    out = x - mean
    var = jnp.mean(out ** 2, axis=-1, keepdims=True)
    std = jnp.sqrt(var + eps)
    return (out / std) * weight + bias


if __name__ == "__main__":
    key = jax.random.PRNGKey(0)

    # (B, S, H, C, dtype, tol)
    #  1) H not 128-aligned (full-dim block), N divides the tile.
    #  2) H 128-aligned with a ragged row count -> exercises the no-pad
    #     partial-last-block path.
    #  3) bf16 I/O (native-dtype MXU matmul, bf16 stores, sublane-16 tiles).
    configs = [
        (2, 8, 32, 16, jnp.float32, 1e-5),
        (2, 9, 128, 16, jnp.float32, 1e-5),
        (2, 16, 128, 16, jnp.bfloat16, 5e-2),
    ]

    for (B, S, H, C, dtype, tol) in configs:
        key, kx, kc, kw, kb = jax.random.split(key, 5)
        x = jax.random.normal(kx, (B, S, H), dtype=jnp.float32)
        cond = jax.random.normal(kc, (B, S, C), dtype=jnp.float32)

        # Parameters (shapes from __init__). The module's reset initializes the
        # dense weights to zero; use small deterministic random values so the
        # conditional matmul path is actually exercised; gamma=1, beta=0.
        gamma = jnp.ones((H,), dtype=jnp.float32)             # self.weight
        beta = jnp.zeros((H,), dtype=jnp.float32)             # self.bias
        w_weight = 0.02 * jax.random.normal(kw, (H, C), dtype=jnp.float32)
        w_bias = 0.02 * jax.random.normal(kb, (H, C), dtype=jnp.float32)

        xd = x.astype(dtype)
        cd = cond.astype(dtype)

        out = conditional_layer_norm(xd, cd, gamma, beta, w_weight, w_bias)
        out = jax.block_until_ready(out)

        assert out.shape == (B, S, H)
        assert out.dtype == dtype

        # Reference computed in f32 on the (possibly bf16-rounded) inputs.
        ref = _reference(xd.astype(jnp.float32), cd.astype(jnp.float32),
                         gamma, beta, w_weight, w_bias)
        assert jnp.allclose(out.astype(jnp.float32), ref, atol=tol, rtol=tol), (
            f"mismatch vs reference for shape {(B, S, H, C)} dtype {dtype}")

    print("KERNEL_OK")
</pallas_src>

<mosaic_0001>
module attributes {stable_mosaic.version = 11 : i64} {
  func.func @kernel(%arg0: i32, %arg1: memref<16x32xf32, #tpu.memory_space<vmem>>, %arg2: memref<16x16xf32, #tpu.memory_space<vmem>>, %arg3: memref<16x32xf32, #tpu.memory_space<vmem>>, %arg4: memref<16x32xf32, #tpu.memory_space<vmem>>, %arg5: memref<1x32xf32, #tpu.memory_space<vmem>>, %arg6: memref<1x32xf32, #tpu.memory_space<vmem>>, %arg7: memref<16x32xf32, #tpu.memory_space<vmem>>) attributes {dimension_semantics = [#tpu.dimension_semantics<parallel>], iteration_bounds = array<i64: 1>, scalar_prefetch = 0 : i64, scratch_operands = 0 : i64, tpu.core_type = #tpu.core_type<tc>, window_params = [{transform_indices = @transform_0, window_bounds = array<i64: 16, 32>}, {transform_indices = @transform_1, window_bounds = array<i64: 16, 16>}, {pipeline_mode = #tpu.pipeline_mode<synchronous>, transform_indices = @transform_2, window_bounds = array<i64: 16, 32>}, {pipeline_mode = #tpu.pipeline_mode<synchronous>, transform_indices = @transform_3, window_bounds = array<i64: 16, 32>}, {pipeline_mode = #tpu.pipeline_mode<synchronous>, transform_indices = @transform_4, window_bounds = array<i64: 1, 32>}, {pipeline_mode = #tpu.pipeline_mode<synchronous>, transform_indices = @transform_5, window_bounds = array<i64: 1, 32>}, {transform_indices = @transform_6, window_bounds = array<i64: 16, 32>}]} {
    %c0 = arith.constant 0 : index
    %c0_0 = arith.constant 0 : index
    %0 = vector.load %arg1[%c0, %c0_0] : memref<16x32xf32, #tpu.memory_space<vmem>>, vector<16x32xf32>
    %c0_1 = arith.constant 0 : index
    %c0_2 = arith.constant 0 : index
    %1 = vector.load %arg2[%c0_1, %c0_2] : memref<16x16xf32, #tpu.memory_space<vmem>>, vector<16x16xf32>
    %c0_3 = arith.constant 0 : index
    %c0_4 = arith.constant 0 : index
    %2 = vector.load %arg3[%c0_3, %c0_4] : memref<16x32xf32, #tpu.memory_space<vmem>>, vector<16x32xf32>
    %cst = arith.constant dense<0.000000e+00> : vector<16x32xf32>
    %3 = tpu.matmul %1, %2, %cst {dimension_numbers = #tpu.dot_dimension_numbers<[1], [0], [0], [1], [0, 0, 1, 1], [], []>} : vector<16x16xf32>, vector<16x32xf32>, vector<16x32xf32> -> vector<16x32xf32>
    %c0_5 = arith.constant 0 : index
    %c0_6 = arith.constant 0 : index
    %4 = vector.load %arg5[%c0_5, %c0_6] : memref<1x32xf32, #tpu.memory_space<vmem>>, vector<1x32xf32>
    %5 = vector.broadcast %4 : vector<1x32xf32> to vector<16x32xf32>
    %6 = arith.addf %3, %5 : vector<16x32xf32>
    %c0_7 = arith.constant 0 : index
    %c0_8 = arith.constant 0 : index
    %7 = vector.load %arg4[%c0_7, %c0_8] : memref<16x32xf32, #tpu.memory_space<vmem>>, vector<16x32xf32>
    %cst_9 = arith.constant dense<0.000000e+00> : vector<16x32xf32>
    %8 = tpu.matmul %1, %7, %cst_9 {dimension_numbers = #tpu.dot_dimension_numbers<[1], [0], [0], [1], [0, 0, 1, 1], [], []>} : vector<16x16xf32>, vector<16x32xf32>, vector<16x32xf32> -> vector<16x32xf32>
    %c0_10 = arith.constant 0 : index
    %c0_11 = arith.constant 0 : index
    %9 = vector.load %arg6[%c0_10, %c0_11] : memref<1x32xf32, #tpu.memory_space<vmem>>, vector<1x32xf32>
    %10 = vector.broadcast %9 : vector<1x32xf32> to vector<16x32xf32>
    %11 = arith.addf %8, %10 : vector<16x32xf32>
    %cst_12 = arith.constant dense<0.000000e+00> : vector<16xf32>
    %12 = vector.multi_reduction <add>, %0, %cst_12 [1] : vector<16x32xf32> to vector<16xf32>
    %13 = vector.shape_cast %12 : vector<16xf32> to vector<16x1xf32>
    %cst_13 = arith.constant 3.200000e+01 : f32
    %14 = vector.broadcast %cst_13 : f32 to vector<16x1xf32>
    %15 = arith.divf %13, %14 : vector<16x1xf32>
    %16 = arith.mulf %0, %0 : vector<16x32xf32>
    %cst_14 = arith.constant dense<0.000000e+00> : vector<16xf32>
    %17 = vector.multi_reduction <add>, %16, %cst_14 [1] : vector<16x32xf32> to vector<16xf32>
    %18 = vector.shape_cast %17 : vector<16xf32> to vector<16x1xf32>
    %cst_15 = arith.constant 3.200000e+01 : f32
    %19 = vector.broadcast %cst_15 : f32 to vector<16x1xf32>
    %20 = arith.divf %18, %19 : vector<16x1xf32>
    %21 = arith.mulf %15, %15 : vector<16x1xf32>
    %22 = arith.subf %20, %21 : vector<16x1xf32>
    %cst_16 = arith.constant 9.99999996E-13 : f32
    %23 = vector.broadcast %cst_16 : f32 to vector<16x1xf32>
    %24 = arith.addf %22, %23 : vector<16x1xf32>
    %25 = math.rsqrt %24 : vector<16x1xf32>
    %26 = vector.broadcast %25 : vector<16x1xf32> to vector<16x32xf32>
    %27 = arith.mulf %26, %6 : vector<16x32xf32>
    %28 = vector.broadcast %15 : vector<16x1xf32> to vector<16x32xf32>
    %29 = arith.mulf %28, %27 : vector<16x32xf32>
    %30 = arith.subf %11, %29 : vector<16x32xf32>
    %31 = arith.mulf %0, %27 : vector<16x32xf32>
    %32 = arith.addf %31, %30 : vector<16x32xf32>
    %c0_17 = arith.constant 0 : index
    %c0_18 = arith.constant 0 : index
    %33 = vector.load %arg7[%c0_17, %c0_18] : memref<16x32xf32, #tpu.memory_space<vmem>>, vector<16x32xf32>
    tpu.vector_store %arg7[%c0_17, %c0_18], %32 {strides = array<i32>} : memref<16x32xf32, #tpu.memory_space<vmem>>, vector<16x32xf32>,
    return
  }
  func.func @transform_0(%arg0: i32) -> (i32, i32) {
    %c0_i32 = arith.constant 0 : i32
    %c0_i32_0 = arith.constant 0 : i32
    return %arg0, %c0_i32 : i32, i32
  }
  func.func @transform_1(%arg0: i32) -> (i32, i32) {
    %c0_i32 = arith.constant 0 : i32
    %c0_i32_0 = arith.constant 0 : i32
    return %arg0, %c0_i32 : i32, i32
  }
  func.func @transform_2(%arg0: i32) -> (i32, i32) {
    %c0_i32 = arith.constant 0 : i32
    %c0_i32_0 = arith.constant 0 : i32
    %c0_i32_1 = arith.constant 0 : i32
    return %c0_i32, %c0_i32_0 : i32, i32
  }
  func.func @transform_3(%arg0: i32) -> (i32, i32) {
    %c0_i32 = arith.constant 0 : i32
    %c0_i32_0 = arith.constant 0 : i32
    %c0_i32_1 = arith.constant 0 : i32
    return %c0_i32, %c0_i32_0 : i32, i32
  }
  func.func @transform_4(%arg0: i32) -> (i32, i32) {
    %c0_i32 = arith.constant 0 : i32
    %c0_i32_0 = arith.constant 0 : i32
    %c0_i32_1 = arith.constant 0 : i32
    return %c0_i32, %c0_i32_0 : i32, i32
  }
  func.func @transform_5(%arg0: i32) -> (i32, i32) {
    %c0_i32 = arith.constant 0 : i32
    %c0_i32_0 = arith.constant 0 : i32
    %c0_i32_1 = arith.constant 0 : i32
    return %c0_i32, %c0_i32_0 : i32, i32
  }
  func.func @transform_6(%arg0: i32) -> (i32, i32) {
    %c0_i32 = arith.constant 0 : i32
    %c0_i32_0 = arith.constant 0 : i32
    return %arg0, %c0_i32 : i32, i32
  }
}

</mosaic_0001>

<llo_original>
// kernel: tpu_custom_call.1
$region0: #{tpu_custom_call.1}
  #allocation0 [shape = 'u32[]', space=smem, size = 0x4, offset = 0x4, fixed_abs, tag = 'smem constant byte address 0x4 - core index']
  #allocation1 [shape = 'u32[144,128]{1,0:T(1,128)}', space=vmem, size = 0x12000, scoped, tag = 'internal scratch']
  %s0 = inlined_call_operand.hbm [shape: f32[16,32], index: 0, kind: input, shape index: {}]
  %s1 = inlined_call_operand.hbm [shape: f32[16,16], index: 1, kind: input, shape index: {}]
  %s2 = inlined_call_operand.hbm [shape: f32[16,32], index: 2, kind: input, shape index: {}]
  %s3 = inlined_call_operand.hbm [shape: f32[16,32], index: 3, kind: input, shape index: {}]
  %s4 = inlined_call_operand.vmem [shape: f32[1,32], index: 4, kind: input, shape index: {}]
  %s5 = inlined_call_operand.vmem [shape: f32[1,32], index: 5, kind: input, shape index: {}]
  %s6 = inlined_call_operand.hbm [shape: f32[16,32], index: 6, kind: output, shape index: {}]
  %s7 = sld [smem:[#allocation0]]
  $region50: #{tpu_custom_call.1} parent=0
    _
  %s9 = ssub.s32 1, %s7
  %s10 = scalar_select 0, %s9, %s7
  $region1: #{tpu_custom_call.1} parent=0
    #allocation2 [shape = 'u8[8192]{0}', space=vmem, size = 0x2000, scoped, tag = 'input window, operand 0, single buffered']
    #allocation3 [shape = 's32[1]{0}', space=sflag, size = 0x4, scoped, tag = 'scoped memory for tpu_custom_call.1']
    #allocation4 [shape = 's32[1]{0}', space=sflag, size = 0x4, scoped, tag = 'scoped memory for tpu_custom_call.1']
    #allocation5 [shape = 'u8[8192]{0}', space=vmem, size = 0x2000, scoped, tag = 'input window, operand 1, single buffered']
    #allocation6 [shape = 's32[1]{0}', space=sflag, size = 0x4, scoped, tag = 'scoped memory for tpu_custom_call.1']
    #allocation7 [shape = 'u8[8192]{0}', space=vmem, size = 0x2000, scoped, tag = 'input window, operand 2, single buffered']
    #allocation8 [shape = 'u8[8192]{0}', space=vmem, size = 0x2000, scoped, tag = 'input window, operand 3, single buffered']
    #allocation9 [shape = 's32[1]{0}', space=sflag, size = 0x4, scoped, tag = 'scoped memory for tpu_custom_call.1']
    #allocation10 [shape = 'u8[8192]{0}', space=vmem, size = 0x2000, scoped, tag = 'output window, operand 0, single buffered']
    %11 = vsyncpa [#allocation3], 0
    %12 = vsyncpa [#allocation6], 0
    %13 = vsyncpa [#allocation9], 0
    %14 = vsyncpa [#allocation4], 0
    // Predicated region
    $region2: #{tpu_custom_call.1} parent=1 // pred_check
      _
    $region3: #{tpu_custom_call.1} parent=1 // pred_check_branch
      %16 = sbr.rel (0) target = $region5
    $region4: #{tpu_custom_call.1} parent=1 // pred_region
      %s18 = ssub.s32 256, 256
      %19 = vsyncadd [#allocation3], %s18
      %s20 = sshll.u32 [#allocation2], 4
      %s21 = int_to_ptr.vmem [resolvable:$true] %s20
      %26 = dma.hbm_to_vmem [thread:$0]  %s0, 256, %s21, [#allocation3], 128, 128, 8
    $region5: #{tpu_custom_call.1} parent=1 // pred_fallthru
      _
    // Predicated region
    $region6: #{tpu_custom_call.1} parent=1 // pred_check
      _
    $region7: #{tpu_custom_call.1} parent=1 // pred_check_branch
      %28 = sbr.rel (0) target = $region9
    $region8: #{tpu_custom_call.1} parent=1 // pred_region
      %s30 = ssub.s32 256, 256
      %31 = vsyncadd [#allocation6], %s30
      %s32 = sshll.u32 [#allocation5], 4
      %s33 = int_to_ptr.vmem [resolvable:$true] %s32
      %38 = dma.hbm_to_vmem [thread:$0]  %s1, 256, %s33, [#allocation6], 128, 128, 8
    $region9: #{tpu_custom_call.1} parent=1 // pred_fallthru
      _
    // Predicated region
    $region10: #{tpu_custom_call.1} parent=1 // pred_check
      _
    $region11: #{tpu_custom_call.1} parent=1 // pred_check_branch
      %40 = sbr.rel (0) target = $region13
    $region12: #{tpu_custom_call.1} parent=1 // pred_region
      %s42 = ssub.s32 256, 256
      %43 = vsyncadd [#allocation6], %s42
      %s44 = sshll.u32 [#allocation7], 4
      %s45 = int_to_ptr.vmem [resolvable:$true] %s44
      %50 = dma.hbm_to_vmem [thread:$0]  %s2, 256, %s45, [#allocation6], 128, 128, 8
    $region13: #{tpu_custom_call.1} parent=1 // pred_fallthru
      _
    // Predicated region
    $region14: #{tpu_custom_call.1} parent=1 // pred_check
      _
    $region15: #{tpu_custom_call.1} parent=1 // pred_check_branch
      %52 = sbr.rel (0) target = $region17
    $region16: #{tpu_custom_call.1} parent=1 // pred_region
      %s54 = ssub.s32 256, 256
      %55 = vsyncadd [#allocation9], %s54
      %s56 = sshll.u32 [#allocation8], 4
      %s57 = int_to_ptr.vmem [resolvable:$true] %s56
      %62 = dma.hbm_to_vmem [thread:$0]  %s3, 256, %s57, [#allocation9], 128, 128, 8
    $region17: #{tpu_custom_call.1} parent=1 // pred_fallthru
      _
    // Predicated region
    $region18: #{tpu_custom_call.1} parent=1 // pred_check
      _
    $region19: #{tpu_custom_call.1} parent=1 // pred_check_branch
      %64 = sbr.rel (0) target = $region21
    $region20: #{tpu_custom_call.1} parent=1 // pred_region
      _
    $region21: #{tpu_custom_call.1} parent=1 // pred_fallthru
      _
    // Predicated region
    $region22: #{tpu_custom_call.1} parent=1 // pred_check
      _
    $region23: #{tpu_custom_call.1} parent=1 // pred_check_branch
      %66 = sbr.rel (0) target = $region25
    $region24: #{tpu_custom_call.1} parent=1 // pred_region
      _
    $region25: #{tpu_custom_call.1} parent=1 // pred_fallthru
      _
    // Predicated region
    $region26: #{tpu_custom_call.1} parent=1 // pred_check
      _
    $region27: #{tpu_custom_call.1} parent=1 // pred_check_branch
      %68 = sbr.rel (0) target = $region29
    $region28: #{tpu_custom_call.1} parent=1 // pred_region
      %69 = dma.done [#allocation3], 256
    $region29: #{tpu_custom_call.1} parent=1 // pred_fallthru
      _
    // Predicated region
    $region30: #{tpu_custom_call.1} parent=1 // pred_check
      _
    $region31: #{tpu_custom_call.1} parent=1 // pred_check_branch
      %71 = sbr.rel (0) target = $region33
    $region32: #{tpu_custom_call.1} parent=1 // pred_region
      %72 = dma.done [#allocation6], 256
    $region33: #{tpu_custom_call.1} parent=1 // pred_fallthru
      _
    // Predicated region
    $region34: #{tpu_custom_call.1} parent=1 // pred_check
      _
    $region35: #{tpu_custom_call.1} parent=1 // pred_check_branch
      %74 = sbr.rel (0) target = $region37
    $region36: #{tpu_custom_call.1} parent=1 // pred_region
      %75 = dma.done [#allocation6], 256
    $region37: #{tpu_custom_call.1} parent=1 // pred_fallthru
      _
    // Predicated region
    $region38: #{tpu_custom_call.1} parent=1 // pred_check
      _
    $region39: #{tpu_custom_call.1} parent=1 // pred_check_branch
      %77 = sbr.rel (0) target = $region41
    $region40: #{tpu_custom_call.1} parent=1 // pred_region
      %78 = dma.done [#allocation9], 256
    $region41: #{tpu_custom_call.1} parent=1 // pred_fallthru
      _
    %v79 = vld [vmem:[#allocation2] sm:$0xff]
    %v80 = vld [vmem:[#allocation2 + $0x8] sm:$0xff]
    %v81 = vld [vmem:[#allocation5] sm:$0xff]
    %v82 = vld [vmem:[#allocation5 + $0x8] sm:$0xff]
    %v83 = vld [vmem:[#allocation7] sm:$0xff]
    %v84 = vld [vmem:[#allocation7 + $0x8] sm:$0xff]
    %v85 = vld [vmem:[%s4] sm:$0x1]
    %v87 = vlaneseq
    %v88 = vshrl.u32 %v87, 7
    %v89 = vsub.s32 0, %v88
    %v90 = vrot.slane %v85, %v89
    %vm92 = vcmask 130048
    %v94 = vsel %vm92, %v81, 0
    %v97 = vsel %vm92, %v82, 0
    %99 = vmatprep.subr.mxu0 0.0
    %100 = vmatpush1.msra.mxu0 %v83
    %101 = vmatprep.subr.mxu0 0.0
    %102 = vmatpush1.msra.mxu0 %v84
    %103 = vmatprep.subr.mxu0 0.0
    %104 = vmatpush1.msra.mxu0 0.0
    %105 = vmatprep.subr.mxu0 0.0
    %106 = vmatpush1.msra.mxu0 0.0
    %107 = vmatprep.subr.mxu0 0.0
    %108 = vmatpush1.msra.mxu0 0.0
    %109 = vmatprep.subr.mxu0 0.0
    %110 = vmatpush1.msra.mxu0 0.0
    %111 = vmatprep.subr.mxu0 0.0
    %112 = vmatpush1.msra.mxu0 0.0
    %113 = vmatprep.subr.mxu0 0.0
    %114 = vmatpush1.msra.mxu0 0.0
    %115 = vmatprep.subr.mxu0 0.0
    %116 = vmatpush1.msra.mxu0 0.0
    %117 = vmatprep.subr.mxu0 0.0
    %118 = vmatpush1.msra.mxu0 0.0
    %119 = vmatprep.subr.mxu0 0.0
    %120 = vmatpush1.msra.mxu0 0.0
    %121 = vmatprep.subr.mxu0 0.0
    %122 = vmatpush1.msra.mxu0 0.0
    %123 = vmatprep.subr.mxu0 0.0
    %124 = vmatpush1.msra.mxu0 0.0
    %125 = vmatprep.subr.mxu0 0.0
    %126 = vmatpush1.msra.mxu0 0.0
    %127 = vmatprep.subr.mxu0 0.0
    %128 = vmatpush1.msra.mxu0 0.0
    %129 = vmatprep.subr.mxu0 0.0
    %130 = vmatpush1.msra.mxu0 0.0
    %131 = vmatprep.subr.mxu0 0.0
    %132 = vmatpush1.msra.mxu0 0.0
    %133 = vmatprep.subr.mxu0 0.0
    %134 = vmatpush1.msra.mxu0 0.0
    %135 = vmatprep.subr.mxu0 0.0
    %136 = vmatpush1.msra.mxu0 0.0
    %137 = vmatprep.subr.mxu0 0.0
    %138 = vmatpush1.msra.mxu0 0.0
    %139 = vmatprep.subr.mxu0 0.0
    %140 = vmatpush1.msra.mxu0 0.0
    %141 = vmatprep.subr.mxu0 0.0
    %142 = vmatpush1.msra.mxu0 0.0
    %143 = vmatprep.subr.mxu0 0.0
    %144 = vmatpush1.msra.mxu0 0.0
    %145 = vmatprep.subr.mxu0 0.0
    %146 = vmatpush1.msra.mxu0 0.0
    %147 = vmatprep.subr.mxu0 0.0
    %148 = vmatpush1.msra.mxu0 0.0
    %149 = vmatprep.subr.mxu0 0.0
    %150 = vmatpush1.msra.mxu0 0.0
    %151 = vmatprep.subr.mxu0 0.0
    %152 = vmatpush1.msra.mxu0 0.0
    %153 = vmatprep.subr.mxu0 0.0
    %154 = vmatpush1.msra.mxu0 0.0
    %155 = vmatprep.subr.mxu0 0.0
    %156 = vmatpush1.msra.mxu0 0.0
    %157 = vmatprep.subr.mxu0 0.0
    %158 = vmatpush1.msra.mxu0 0.0
    %159 = vmatprep.subr.mxu0 0.0
    %160 = vmatpush1.msra.mxu0 0.0
    %161 = vmatprep.subr.mxu0 0.0
    %162 = vmatpush1.msra.mxu0 0.0
    %163 = vmatprep.mubr.f32.mxu0 0.0
    %164 = vmatmul.mubr.f32.gmra.mrb[0].mxu0 %v94
    %v165 = vpop.f32.mrb[0].mxu0
    %v166 = vadd.f32 %v90, %v165
    %v167 = vpop.f32.mrb[0].mxu0
    %168 = vmatprep.mubr.f32.mxu0 0.0
    %169 = vmatmul.mubr.f32.gmra.mrb[0].mxu0 %v97
    %v170 = vpop.f32.mrb[0].mxu0
    %v171 = vadd.f32 %v90, %v170
    %v172 = vpop.f32.mrb[0].mxu0
    %173 = vdwg.mxu0
    %v174 = vld [vmem:[#allocation8] sm:$0xff]
    %v175 = vld [vmem:[#allocation8 + $0x8] sm:$0xff]
    %v176 = vld [vmem:[%s5] sm:$0x1]
    %v178 = vlaneseq
    %v179 = vshrl.u32 %v178, 7
    %v180 = vsub.s32 0, %v179
    %v181 = vrot.slane %v176, %v180
    %183 = vmatprep.subr.mxu0 0.0
    %184 = vmatpush1.msra.mxu0 %v174
    %185 = vmatprep.subr.mxu0 0.0
    %186 = vmatpush1.msra.mxu0 %v175
    %187 = vmatprep.subr.mxu0 0.0
    %188 = vmatpush1.msra.mxu0 0.0
    %189 = vmatprep.subr.mxu0 0.0
    %190 = vmatpush1.msra.mxu0 0.0
    %191 = vmatprep.subr.mxu0 0.0
    %192 = vmatpush1.msra.mxu0 0.0
    %193 = vmatprep.subr.mxu0 0.0
    %194 = vmatpush1.msra.mxu0 0.0
    %195 = vmatprep.subr.mxu0 0.0
    %196 = vmatpush1.msra.mxu0 0.0
    %197 = vmatprep.subr.mxu0 0.0
    %198 = vmatpush1.msra.mxu0 0.0
    %199 = vmatprep.subr.mxu0 0.0
    %200 = vmatpush1.msra.mxu0 0.0
    %201 = vmatprep.subr.mxu0 0.0
    %202 = vmatpush1.msra.mxu0 0.0
    %203 = vmatprep.subr.mxu0 0.0
    %204 = vmatpush1.msra.mxu0 0.0
    %205 = vmatprep.subr.mxu0 0.0
    %206 = vmatpush1.msra.mxu0 0.0
    %207 = vmatprep.subr.mxu0 0.0
    %208 = vmatpush1.msra.mxu0 0.0
    %209 = vmatprep.subr.mxu0 0.0
    %210 = vmatpush1.msra.mxu0 0.0
    %211 = vmatprep.subr.mxu0 0.0
    %212 = vmatpush1.msra.mxu0 0.0
    %213 = vmatprep.subr.mxu0 0.0
    %214 = vmatpush1.msra.mxu0 0.0
    %215 = vmatprep.subr.mxu0 0.0
    %216 = vmatpush1.msra.mxu0 0.0
    %217 = vmatprep.subr.mxu0 0.0
    %218 = vmatpush1.msra.mxu0 0.0
    %219 = vmatprep.subr.mxu0 0.0
    %220 = vmatpush1.msra.mxu0 0.0
    %221 = vmatprep.subr.mxu0 0.0
    %222 = vmatpush1.msra.mxu0 0.0
    %223 = vmatprep.subr.mxu0 0.0
    %224 = vmatpush1.msra.mxu0 0.0
    %225 = vmatprep.subr.mxu0 0.0
    %226 = vmatpush1.msra.mxu0 0.0
    %227 = vmatprep.subr.mxu0 0.0
    %228 = vmatpush1.msra.mxu0 0.0
    %229 = vmatprep.subr.mxu0 0.0
    %230 = vmatpush1.msra.mxu0 0.0
    %231 = vmatprep.subr.mxu0 0.0
    %232 = vmatpush1.msra.mxu0 0.0
    %233 = vmatprep.subr.mxu0 0.0
    %234 = vmatpush1.msra.mxu0 0.0
    %235 = vmatprep.subr.mxu0 0.0
    %236 = vmatpush1.msra.mxu0 0.0
    %237 = vmatprep.subr.mxu0 0.0
    %238 = vmatpush1.msra.mxu0 0.0
    %239 = vmatprep.subr.mxu0 0.0
    %240 = vmatpush1.msra.mxu0 0.0
    %241 = vmatprep.subr.mxu0 0.0
    %242 = vmatpush1.msra.mxu0 0.0
    %243 = vmatprep.subr.mxu0 0.0
    %244 = vmatpush1.msra.mxu0 0.0
    %245 = vmatprep.subr.mxu0 0.0
    %246 = vmatpush1.msra.mxu0 0.0
    %247 = vmatprep.mubr.f32.mxu0 0.0
    %248 = vmatmul.mubr.f32.gmra.mrb[0].mxu0 %v94
    %v249 = vpop.f32.mrb[0].mxu0
    %v250 = vadd.f32 %v181, %v249
    %v251 = vpop.f32.mrb[0].mxu0
    %252 = vmatprep.mubr.f32.mxu0 0.0
    %253 = vmatmul.mubr.f32.gmra.mrb[0].mxu0 %v97
    %v254 = vpop.f32.mrb[0].mxu0
    %v255 = vadd.f32 %v181, %v254
    %v256 = vpop.f32.mrb[0].mxu0
    %257 = vdwg.mxu0
    %vm258 = vcmask 261120
    %v259 = vsel %vm258, %v79, 0.0
    %260 = vadd.xlane.f32.xlu0 %v259
    %v261 = vpop.xlane.xlu0 %260
    %v262 = vsel %vm258, %v80, 0.0
    %263 = vadd.xlane.f32.xlu0 %v262
    %v264 = vpop.xlane.xlu0 %263
    %v265 = vrcp.pop 32.0
    %v266 = vmul.f32 %v261, %v265
    %v267 = vmul.f32 %v264, %v265
    %v268 = vmul.f32 %v79, %v79
    %v269 = vmul.f32 %v80, %v80
    %v270 = vsel %vm258, %v268, 0.0
    %271 = vadd.xlane.f32.xlu0 %v270
    %v272 = vpop.xlane.xlu0 %271
    %v273 = vsel %vm258, %v269, 0.0
    %274 = vadd.xlane.f32.xlu0 %v273
    %v275 = vpop.xlane.xlu0 %274
    %v276 = vmul.f32 %v272, %v265
    %v277 = vmul.f32 %v275, %v265
    %v278 = vmul.f32 %v266, %v266
    %v279 = vmul.f32 %v267, %v267
    %v280 = vsub.f32 %v276, %v278
    %v281 = vsub.f32 %v277, %v279
    %v282 = vadd.f32 %v280, 1e-12
    %v283 = vadd.f32 %v281, 1e-12
    %v284 = vrsqrt.pop %v282
    %v285 = vrsqrt.pop %v283
    %v286 = vmul.f32 %v284, %v166
    %v287 = vmul.f32 %v285, %v171
    %v288 = vmul.f32 %v266, %v286
    %v289 = vmul.f32 %v267, %v287
    %v290 = vsub.f32 %v250, %v288
    %v291 = vsub.f32 %v255, %v289
    %v292 = vmul.f32 %v79, %v286
    %v293 = vmul.f32 %v80, %v287
    %v294 = vadd.f32 %v292, %v290
    %v295 = vadd.f32 %v293, %v291
    %296 = vst.msk [vmem:[#allocation10] sm:$0xff] %vm258, %v294
    %297 = vst.msk [vmem:[#allocation10 + $0x8] sm:$0xff] %vm258, %v295
    // Predicated region
    $region42: #{tpu_custom_call.1} parent=1 // pred_check
      _
    $region43: #{tpu_custom_call.1} parent=1 // pred_check_branch
      %299 = sbr.rel (0) target = $region45
    $region44: #{tpu_custom_call.1} parent=1 // pred_region
      %s301 = ssub.s32 256, 256
      %302 = vsyncadd [#allocation4], %s301
      %s303 = sshll.u32 [#allocation10], 4
      %s304 = int_to_ptr.vmem [resolvable:$true] %s303
      %309 = dma.vmem_to_hbm [thread:$0]  %s304, 256, %s6, [#allocation4], 128, 128, 8
    $region45: #{tpu_custom_call.1} parent=1 // pred_fallthru
      _
    // Predicated region
    $region46: #{tpu_custom_call.1} parent=1 // pred_check
      _
    $region47: #{tpu_custom_call.1} parent=1 // pred_check_branch
      %311 = sbr.rel (0) target = $region49
    $region48: #{tpu_custom_call.1} parent=1 // pred_region
      %312 = dma.done [#allocation4], 256
    $region49: #{tpu_custom_call.1} parent=1 // pred_fallthru
      _
    %313 = vsyncpa [#allocation3], 1
    %314 = vsyncpa [#allocation6], 1
    %315 = vsyncpa [#allocation9], 1
    %316 = vsyncpa [#allocation4], 1

</llo_original>
